<compile_context>
chip_gen: v6e
topology: v6e:2x2x1
jax: 0.10.0
libtpu: 0.0.40
codegen_flags: <defaults>
</compile_context>

<pallas_src>
import jax
import jax.numpy as jnp
from jax.experimental import pallas as pl
from jax.experimental.pallas import tpu as pltpu


def attention_kernel(s_ref, l_ref, w1_ref, b1_ref, w2_ref, g_ref, o_ref):
    # Packed tiles: each 128-lane row holds P consecutive examples of Ep dims.
    s_p = s_ref[...]                       # (tb, Wp)   bf16
    l_p = l_ref[...]                       # (tb, Wp)   bf16
    w1b = w1_ref[...]                      # (Wp, P*H)  bf16, block-diagonal
    b1 = b1_ref[...]                       # (1,  P*H)  f32
    w2 = w2_ref[...]                       # (1,  P*H)  f32
    g = g_ref[...]                         # (P*H, Wp)  f32, 0/1 segment-sum

    # First Linear + ReLU for both branches: same resident RHS, two dots
    # (no concatenate / slice copies).  MXU with f32 accumulation.
    hs = jnp.maximum(
        jnp.dot(s_p, w1b, preferred_element_type=jnp.float32) + b1, 0.0)
    hl = jnp.maximum(
        jnp.dot(l_p, w1b, preferred_element_type=jnp.float32) + b1, 0.0)
    # (Dropout: identity in eval mode.  b2 cancels in the 2-way softmax.)

    # Second Linear folded in as a lane multiply; the matmul with G both
    # segment-sums each example's H lanes (logit_long - logit_short) and
    # broadcasts the scalar back onto that example's Ep output lanes — one MXU
    # pass, no XLU reduce, no reshape.
    d = (hl - hs) * w2                                        # (tb, P*H) f32
    dlog = jnp.dot(d, g, preferred_element_type=jnp.float32)  # (tb, Wp)  f32

    # 2-way softmax == sigmoid of the logit difference.  Clamp so the EUP
    # approx reciprocal never sees inf.
    dlog = jnp.clip(dlog, -30.0, 30.0)
    w_s = pl.reciprocal(1.0 + jnp.exp(dlog), approx=True)     # weight of "short"

    # user_rep = w_s*s + (1-w_s)*l  ==  l + w_s*(s - l)   (one fewer vmul).
    s_f = s_p.astype(jnp.float32)
    l_f = l_p.astype(jnp.float32)
    o_ref[...] = (l_f + w_s * (s_f - l_f)).astype(o_ref.dtype)


def _round_up(x, m):
    return ((x + m - 1) // m) * m


def attention_layer(short_emb, long_emb, w1, b1, w2_row, *, block_b=4096):
    """AttentionLayer forward.

    short_emb, long_emb : (B, E)
    w1     : (E, H)  transpose of nn.Linear(E, H).weight
    b1     : (1, H)
    w2_row : (1, H)  nn.Linear(H, 1).weight as a row (its bias cancels)
    block_b: target examples per grid step (sweep 2048-8192 for small E).
    """
    B, E = short_emb.shape
    H = w1.shape[1]
    SUB = 16                     # sublane granularity for bf16 tiles

    # --- packed-layout parameters -------------------------------------------
    # Pad E up to Ep so rows pack lane-densely: either Ep | 128 (P = 128//Ep
    # examples per 128-lane row) or Ep a multiple of 128 (P = 1).
    if E <= 128:
        Ep = pl.next_power_of_2(E)
        P = 128 // Ep
    else:
        Ep = _round_up(E, 128)
        P = 1
    Wp = P * Ep                  # packed row width (lane-dense)

    # --- batch tiling ---------------------------------------------------------
    rows = pl.cdiv(B, P)                                   # packed rows needed
    tb = max(SUB, (max(block_b, P) // P // SUB) * SUB)     # target rows / step
    tb = min(tb, _round_up(rows, SUB))
    # v7x has 2 TensorCores: keep >= 2 "parallel" grid steps when there is
    # enough data rather than collapsing to a single giant block.
    if _round_up(rows, tb) // tb < 2 and rows >= 2 * SUB:
        tb = max(SUB, _round_up(pl.cdiv(rows, 2), SUB))
    rows_pad = _round_up(rows, tb)
    grid = (rows_pad // tb,)

    # --- operand prep (wrapper-side, cheap / one-off) -------------------------
    # Stream embeddings and the result as bf16 (halves HBM bytes); the kernel
    # upcasts to f32 for all elementwise math.
    s16 = short_emb.astype(jnp.bfloat16)
    l16 = long_emb.astype(jnp.bfloat16)
    pad_b = rows_pad * P - B
    pad_e = Ep - E
    if pad_b or pad_e:
        s16 = jnp.pad(s16, ((0, pad_b), (0, pad_e)))
        l16 = jnp.pad(l16, ((0, pad_b), (0, pad_e)))
    # Row-major (B_pad, Ep) -> (rows_pad, Wp) is a contiguous reshape (free).
    s_pk = s16.reshape(rows_pad, Wp)
    l_pk = l16.reshape(rows_pad, Wp)

    w1p = w1 if pad_e == 0 else jnp.pad(w1, ((0, pad_e), (0, 0)))
    w1_blk = jnp.kron(jnp.eye(P, dtype=jnp.float32),
                      w1p.astype(jnp.float32)).astype(jnp.bfloat16)   # (Wp, P*H)
    b1_rep = jnp.tile(b1.reshape(1, H).astype(jnp.float32), (1, P))   # (1, P*H)
    w2_rep = jnp.tile(w2_row.reshape(1, H).astype(jnp.float32), (1, P))
    g_mat = jnp.kron(jnp.eye(P, dtype=jnp.float32),
                     jnp.ones((H, Ep), jnp.float32))                  # (P*H, Wp)

    row_spec = pl.BlockSpec((tb, Wp), lambda i: (i, 0))          # streamed
    const = lambda shape: pl.BlockSpec(shape, lambda i: (0, 0))  # resident

    out_pk = pl.pallas_call(
        attention_kernel,
        out_shape=jax.ShapeDtypeStruct((rows_pad, Wp), jnp.bfloat16),
        grid=grid,
        in_specs=[
            row_spec,                 # short (packed)
            row_spec,                 # long  (packed)
            const((Wp, P * H)),       # block-diagonal W1
            const((1, P * H)),        # b1 (replicated per packed group)
            const((1, P * H)),        # w2 row (replicated)
            const((P * H, Wp)),       # segment-sum / broadcast matrix
        ],
        out_specs=row_spec,
        compiler_params=pltpu.CompilerParams(
            dimension_semantics=("parallel",)),
        # NOTE: at production E/H raise vmem_limit_bytes (v5e scoped default is
        # 16 MiB, v7x physical VMEM is 64 MiB) or scale block_b down; at these
        # sizes the per-step footprint is a few hundred KB.
    )(s_pk, l_pk, w1_blk, b1_rep, w2_rep, g_mat)

    out = out_pk.reshape(rows_pad * P, Ep)[:B, :E]
    return out.astype(short_emb.dtype)


def reference(short_emb, long_emb, w1, b1, w2_row):
    """Pure-JAX f32 reference mirroring the PyTorch forward (eval mode)."""
    combined = jnp.stack([short_emb, long_emb], axis=1)            # (B, 2, E)
    Bn, N, E = combined.shape
    h = jnp.maximum(combined.reshape(Bn * N, E) @ w1 + b1, 0.0)
    logits = (h * w2_row).sum(axis=-1).reshape(Bn, N)              # +b2 cancels
    attn = jax.nn.softmax(logits, axis=1)[..., None]               # (B, 2, 1)
    return (combined * attn).sum(axis=1)                           # (B, E)


def xavier_uniform(key, fan_in, fan_out, shape):
    bound = (6.0 / (fan_in + fan_out)) ** 0.5
    return jax.random.uniform(key, shape, jnp.float32, -bound, bound)


if __name__ == "__main__":
    B, E, H = 8, 16, 32   # batch, embed_dim, hidden_dim

    key = jax.random.PRNGKey(0)
    k_s, k_l, k_w1, k_w2, k_s2, k_l2 = jax.random.split(key, 6)

    short_emb = jax.random.normal(k_s, (B, E), jnp.float32)
    long_emb = jax.random.normal(k_l, (B, E), jnp.float32)

    # Parameters: xavier_uniform weights, zero biases (matches _initialize_weights).
    # nn.Linear(E, H).weight has shape (H, E); we store its transpose (E, H).
    w1 = xavier_uniform(k_w1, E, H, (E, H))
    b1 = jnp.zeros((1, H), jnp.float32)
    # nn.Linear(H, 1).weight is (1, H); its bias is zero-init AND cancels in the
    # 2-way softmax, so it is not a kernel operand.
    w2_row = xavier_uniform(k_w2, H, 1, (1, H))

    # Reference uses the same bf16-quantized embeddings the kernel streams.
    def q(x):
        return x.astype(jnp.bfloat16).astype(jnp.float32)

    # --- small case: single grid step ---
    out = attention_layer(short_emb, long_emb, w1, b1, w2_row)
    out = jax.block_until_ready(out)
    ref = reference(q(short_emb), q(long_emb), w1, b1, w2_row)
    assert out.shape == (B, E)
    assert jnp.allclose(out.astype(jnp.float32), ref, atol=2e-2, rtol=2e-2), \
        "mismatch vs reference (small)"

    # --- larger case: exercises the batch-tiled grid (>= 2 parallel steps) ---
    B2 = 4096
    short2 = jax.random.normal(k_s2, (B2, E), jnp.float32)
    long2 = jax.random.normal(k_l2, (B2, E), jnp.float32)
    out2 = jax.block_until_ready(attention_layer(short2, long2, w1, b1, w2_row))
    ref2 = reference(q(short2), q(long2), w1, b1, w2_row)
    assert out2.shape == (B2, E)
    assert jnp.allclose(out2.astype(jnp.float32), ref2, atol=2e-2, rtol=2e-2), \
        "mismatch vs reference (tiled)"

    print("KERNEL_OK")
</pallas_src>

<mosaic_0001>
module attributes {stable_mosaic.version = 11 : i64} {
  func.func @attention_kernel(%arg0: i32, %arg1: memref<16x128xbf16, #tpu.memory_space<vmem>>, %arg2: memref<16x128xbf16, #tpu.memory_space<vmem>>, %arg3: memref<128x256xbf16, #tpu.memory_space<vmem>>, %arg4: memref<1x256xf32, #tpu.memory_space<vmem>>, %arg5: memref<1x256xf32, #tpu.memory_space<vmem>>, %arg6: memref<256x128xf32, #tpu.memory_space<vmem>>, %arg7: memref<16x128xbf16, #tpu.memory_space<vmem>>) attributes {dimension_semantics = [#tpu.dimension_semantics<parallel>], iteration_bounds = array<i64: 1>, scalar_prefetch = 0 : i64, scratch_operands = 0 : i64, tpu.core_type = #tpu.core_type<tc>, window_params = [{transform_indices = @transform_0, window_bounds = array<i64: 16, 128>}, {transform_indices = @transform_1, window_bounds = array<i64: 16, 128>}, {pipeline_mode = #tpu.pipeline_mode<synchronous>, transform_indices = @transform_2, window_bounds = array<i64: 128, 256>}, {pipeline_mode = #tpu.pipeline_mode<synchronous>, transform_indices = @transform_3, window_bounds = array<i64: 1, 256>}, {pipeline_mode = #tpu.pipeline_mode<synchronous>, transform_indices = @transform_4, window_bounds = array<i64: 1, 256>}, {pipeline_mode = #tpu.pipeline_mode<synchronous>, transform_indices = @transform_5, window_bounds = array<i64: 256, 128>}, {transform_indices = @transform_6, window_bounds = array<i64: 16, 128>}]} {
    %c0 = arith.constant 0 : index
    %c0_0 = arith.constant 0 : index
    %0 = vector.load %arg1[%c0, %c0_0] : memref<16x128xbf16, #tpu.memory_space<vmem>>, vector<16x128xbf16>
    %c0_1 = arith.constant 0 : index
    %c0_2 = arith.constant 0 : index
    %1 = vector.load %arg2[%c0_1, %c0_2] : memref<16x128xbf16, #tpu.memory_space<vmem>>, vector<16x128xbf16>
    %c0_3 = arith.constant 0 : index
    %c0_4 = arith.constant 0 : index
    %2 = vector.load %arg3[%c0_3, %c0_4] : memref<128x256xbf16, #tpu.memory_space<vmem>>, vector<128x256xbf16>
    %c0_5 = arith.constant 0 : index
    %c0_6 = arith.constant 0 : index
    %3 = vector.load %arg4[%c0_5, %c0_6] : memref<1x256xf32, #tpu.memory_space<vmem>>, vector<1x256xf32>
    %c0_7 = arith.constant 0 : index
    %c0_8 = arith.constant 0 : index
    %4 = vector.load %arg5[%c0_7, %c0_8] : memref<1x256xf32, #tpu.memory_space<vmem>>, vector<1x256xf32>
    %c0_9 = arith.constant 0 : index
    %c0_10 = arith.constant 0 : index
    %5 = vector.load %arg6[%c0_9, %c0_10] : memref<256x128xf32, #tpu.memory_space<vmem>>, vector<256x128xf32>
    %cst = arith.constant dense<0.000000e+00> : vector<16x256xf32>
    %6 = tpu.matmul %0, %2, %cst {dimension_numbers = #tpu.dot_dimension_numbers<[1], [0], [0], [1], [0, 0, 1, 1], [], []>} : vector<16x128xbf16>, vector<128x256xbf16>, vector<16x256xf32> -> vector<16x256xf32>
    %7 = vector.broadcast %3 : vector<1x256xf32> to vector<16x256xf32>
    %8 = arith.addf %6, %7 : vector<16x256xf32>
    %cst_11 = arith.constant 0.000000e+00 : f32
    %9 = vector.broadcast %cst_11 : f32 to vector<16x256xf32>
    %10 = arith.maximumf %8, %9 : vector<16x256xf32>
    %cst_12 = arith.constant dense<0.000000e+00> : vector<16x256xf32>
    %11 = tpu.matmul %1, %2, %cst_12 {dimension_numbers = #tpu.dot_dimension_numbers<[1], [0], [0], [1], [0, 0, 1, 1], [], []>} : vector<16x128xbf16>, vector<128x256xbf16>, vector<16x256xf32> -> vector<16x256xf32>
    %12 = vector.broadcast %3 : vector<1x256xf32> to vector<16x256xf32>
    %13 = arith.addf %11, %12 : vector<16x256xf32>
    %cst_13 = arith.constant 0.000000e+00 : f32
    %14 = vector.broadcast %cst_13 : f32 to vector<16x256xf32>
    %15 = arith.maximumf %13, %14 : vector<16x256xf32>
    %16 = arith.subf %15, %10 : vector<16x256xf32>
    %17 = vector.broadcast %4 : vector<1x256xf32> to vector<16x256xf32>
    %18 = arith.mulf %16, %17 : vector<16x256xf32>
    %cst_14 = arith.constant dense<0.000000e+00> : vector<16x128xf32>
    %19 = tpu.matmul %18, %5, %cst_14 {dimension_numbers = #tpu.dot_dimension_numbers<[1], [0], [0], [1], [0, 0, 1, 1], [], []>} : vector<16x256xf32>, vector<256x128xf32>, vector<16x128xf32> -> vector<16x128xf32>
    %cst_15 = arith.constant -3.000000e+01 : f32
    %cst_16 = arith.constant 3.000000e+01 : f32
    %20 = vector.broadcast %cst_15 : f32 to vector<16x128xf32>
    %21 = arith.maximumf %20, %19 : vector<16x128xf32>
    %22 = vector.broadcast %cst_16 : f32 to vector<16x128xf32>
    %23 = arith.minimumf %22, %21 : vector<16x128xf32>
    %24 = math.exp %23 : vector<16x128xf32>
    %cst_17 = arith.constant 1.000000e+00 : f32
    %25 = vector.broadcast %cst_17 : f32 to vector<16x128xf32>
    %26 = arith.addf %25, %24 : vector<16x128xf32>
    %27 = tpu.reciprocal %26 {approx = true} : vector<16x128xf32> -> vector<16x128xf32>
    %28 = arith.extf %0 : vector<16x128xbf16> to vector<16x128xf32>
    %29 = arith.extf %1 : vector<16x128xbf16> to vector<16x128xf32>
    %30 = arith.subf %28, %29 : vector<16x128xf32>
    %31 = arith.mulf %27, %30 : vector<16x128xf32>
    %32 = arith.addf %29, %31 : vector<16x128xf32>
    %33 = arith.truncf %32 : vector<16x128xf32> to vector<16x128xbf16>
    %c0_18 = arith.constant 0 : index
    %c0_19 = arith.constant 0 : index
    %34 = vector.load %arg7[%c0_18, %c0_19] : memref<16x128xbf16, #tpu.memory_space<vmem>>, vector<16x128xbf16>
    tpu.vector_store %arg7[%c0_18, %c0_19], %33 {strides = array<i32>} : memref<16x128xbf16, #tpu.memory_space<vmem>>, vector<16x128xbf16>,
    return
  }
  func.func @transform_0(%arg0: i32) -> (i32, i32) {
    %c0_i32 = arith.constant 0 : i32
    %c0_i32_0 = arith.constant 0 : i32
    return %arg0, %c0_i32 : i32, i32
  }
  func.func @transform_1(%arg0: i32) -> (i32, i32) {
    %c0_i32 = arith.constant 0 : i32
    %c0_i32_0 = arith.constant 0 : i32
    return %arg0, %c0_i32 : i32, i32
  }
  func.func @transform_2(%arg0: i32) -> (i32, i32) {
    %c0_i32 = arith.constant 0 : i32
    %c0_i32_0 = arith.constant 0 : i32
    %c0_i32_1 = arith.constant 0 : i32
    return %c0_i32, %c0_i32_0 : i32, i32
  }
  func.func @transform_3(%arg0: i32) -> (i32, i32) {
    %c0_i32 = arith.constant 0 : i32
    %c0_i32_0 = arith.constant 0 : i32
    %c0_i32_1 = arith.constant 0 : i32
    return %c0_i32, %c0_i32_0 : i32, i32
  }
  func.func @transform_4(%arg0: i32) -> (i32, i32) {
    %c0_i32 = arith.constant 0 : i32
    %c0_i32_0 = arith.constant 0 : i32
    %c0_i32_1 = arith.constant 0 : i32
    return %c0_i32, %c0_i32_0 : i32, i32
  }
  func.func @transform_5(%arg0: i32) -> (i32, i32) {
    %c0_i32 = arith.constant 0 : i32
    %c0_i32_0 = arith.constant 0 : i32
    %c0_i32_1 = arith.constant 0 : i32
    return %c0_i32, %c0_i32_0 : i32, i32
  }
  func.func @transform_6(%arg0: i32) -> (i32, i32) {
    %c0_i32 = arith.constant 0 : i32
    %c0_i32_0 = arith.constant 0 : i32
    return %arg0, %c0_i32 : i32, i32
  }
}

</mosaic_0001>

<llo_original>
// kernel: tpu_custom_call.1
$region0: #{tpu_custom_call.1}
  #allocation0 [shape = 'u32[]', space=smem, size = 0x4, offset = 0x4, fixed_abs, tag = 'smem constant byte address 0x4 - core index']
  #allocation1 [shape = 'u32[144,128]{1,0:T(1,128)}', space=vmem, size = 0x12000, scoped, tag = 'internal scratch']
  %s0 = inlined_call_operand.hbm [shape: bf16[16,128], index: 0, kind: input, shape index: {}]
  %s1 = inlined_call_operand.hbm [shape: bf16[16,128], index: 1, kind: input, shape index: {}]
  %s2 = inlined_call_operand.hbm [shape: bf16[128,256], index: 2, kind: input, shape index: {}]
  %s3 = inlined_call_operand.vmem [shape: f32[1,256], index: 3, kind: input, shape index: {}]
  %s4 = inlined_call_operand.vmem [shape: f32[1,256], index: 4, kind: input, shape index: {}]
  %s5 = inlined_call_operand.hbm [shape: f32[256,128], index: 5, kind: input, shape index: {}]
  %s6 = inlined_call_operand.hbm [shape: bf16[16,128], index: 6, kind: output, shape index: {}]
  %s7 = sld [smem:[#allocation0]]
  $region50: #{tpu_custom_call.1} parent=0
    _
  %s9 = ssub.s32 1, %s7
  %s10 = scalar_select 0, %s9, %s7
  $region1: #{tpu_custom_call.1} parent=0
    #allocation2 [shape = 'u8[4096]{0}', space=vmem, size = 0x1000, scoped, tag = 'input window, operand 0, single buffered']
    #allocation3 [shape = 's32[1]{0}', space=sflag, size = 0x4, scoped, tag = 'scoped memory for tpu_custom_call.1']
    #allocation4 [shape = 's32[1]{0}', space=sflag, size = 0x4, scoped, tag = 'scoped memory for tpu_custom_call.1']
    #allocation5 [shape = 'u8[4096]{0}', space=vmem, size = 0x1000, scoped, tag = 'input window, operand 1, single buffered']
    #allocation6 [shape = 's32[1]{0}', space=sflag, size = 0x4, scoped, tag = 'scoped memory for tpu_custom_call.1']
    #allocation7 [shape = 'u8[65536]{0}', space=vmem, size = 0x10000, scoped, tag = 'input window, operand 2, single buffered']
    #allocation8 [shape = 'u8[131072]{0}', space=vmem, size = 0x20000, scoped, tag = 'input window, operand 5, single buffered']
    #allocation9 [shape = 's32[1]{0}', space=sflag, size = 0x4, scoped, tag = 'scoped memory for tpu_custom_call.1']
    #allocation10 [shape = 'u8[4096]{0}', space=vmem, size = 0x1000, scoped, tag = 'output window, operand 0, single buffered']
    %11 = vsyncpa [#allocation3], 0
    %12 = vsyncpa [#allocation6], 0
    %13 = vsyncpa [#allocation9], 0
    %14 = vsyncpa [#allocation4], 0
    // Predicated region
    $region2: #{tpu_custom_call.1} parent=1 // pred_check
      _
    $region3: #{tpu_custom_call.1} parent=1 // pred_check_branch
      %16 = sbr.rel (0) target = $region5
    $region4: #{tpu_custom_call.1} parent=1 // pred_region
      %s18 = ssub.s32 128, 128
      %19 = vsyncadd [#allocation3], %s18
      %s20 = sshll.u32 [#allocation2], 4
      %s21 = int_to_ptr.vmem [resolvable:$true] %s20
      %26 = dma.hbm_to_vmem [thread:$0]  %s0, 128, %s21, [#allocation3], 64, 64, 4
    $region5: #{tpu_custom_call.1} parent=1 // pred_fallthru
      _
    // Predicated region
    $region6: #{tpu_custom_call.1} parent=1 // pred_check
      _
    $region7: #{tpu_custom_call.1} parent=1 // pred_check_branch
      %28 = sbr.rel (0) target = $region9
    $region8: #{tpu_custom_call.1} parent=1 // pred_region
      %s30 = ssub.s32 128, 128
      %31 = vsyncadd [#allocation6], %s30
      %s32 = sshll.u32 [#allocation5], 4
      %s33 = int_to_ptr.vmem [resolvable:$true] %s32
      %38 = dma.hbm_to_vmem [thread:$0]  %s1, 128, %s33, [#allocation6], 64, 64, 4
    $region9: #{tpu_custom_call.1} parent=1 // pred_fallthru
      _
    // Predicated region
    $region10: #{tpu_custom_call.1} parent=1 // pred_check
      _
    $region11: #{tpu_custom_call.1} parent=1 // pred_check_branch
      %40 = sbr.rel (0) target = $region13
    $region12: #{tpu_custom_call.1} parent=1 // pred_region
      %s42 = ssub.s32 2048, 2048
      %43 = vsyncadd [#allocation6], %s42
      %s44 = sshll.u32 [#allocation7], 4
      %s45 = int_to_ptr.vmem [resolvable:$true] %s44
      %50 = dma.hbm_to_vmem [thread:$0]  %s2, 2048, %s45, [#allocation6], 128, 128, 8
    $region13: #{tpu_custom_call.1} parent=1 // pred_fallthru
      _
    // Predicated region
    $region14: #{tpu_custom_call.1} parent=1 // pred_check
      _
    $region15: #{tpu_custom_call.1} parent=1 // pred_check_branch
      %52 = sbr.rel (0) target = $region17
    $region16: #{tpu_custom_call.1} parent=1 // pred_region
      _
    $region17: #{tpu_custom_call.1} parent=1 // pred_fallthru
      _
    // Predicated region
    $region18: #{tpu_custom_call.1} parent=1 // pred_check
      _
    $region19: #{tpu_custom_call.1} parent=1 // pred_check_branch
      %54 = sbr.rel (0) target = $region21
    $region20: #{tpu_custom_call.1} parent=1 // pred_region
      _
    $region21: #{tpu_custom_call.1} parent=1 // pred_fallthru
      _
    // Predicated region
    $region22: #{tpu_custom_call.1} parent=1 // pred_check
      _
    $region23: #{tpu_custom_call.1} parent=1 // pred_check_branch
      %56 = sbr.rel (0) target = $region25
    $region24: #{tpu_custom_call.1} parent=1 // pred_region
      %s58 = ssub.s32 4096, 4096
      %59 = vsyncadd [#allocation9], %s58
      %s60 = sshll.u32 [#allocation8], 4
      %s61 = int_to_ptr.vmem [resolvable:$true] %s60
      %66 = dma.hbm_to_vmem [thread:$0]  %s5, 4096, %s61, [#allocation9], 128, 128, 8
    $region25: #{tpu_custom_call.1} parent=1 // pred_fallthru
      _
    // Predicated region
    $region26: #{tpu_custom_call.1} parent=1 // pred_check
      _
    $region27: #{tpu_custom_call.1} parent=1 // pred_check_branch
      %68 = sbr.rel (0) target = $region29
    $region28: #{tpu_custom_call.1} parent=1 // pred_region
      %69 = dma.done [#allocation3], 128
    $region29: #{tpu_custom_call.1} parent=1 // pred_fallthru
      _
    // Predicated region
    $region30: #{tpu_custom_call.1} parent=1 // pred_check
      _
    $region31: #{tpu_custom_call.1} parent=1 // pred_check_branch
      %71 = sbr.rel (0) target = $region33
    $region32: #{tpu_custom_call.1} parent=1 // pred_region
      %72 = dma.done [#allocation6], 128
    $region33: #{tpu_custom_call.1} parent=1 // pred_fallthru
      _
    // Predicated region
    $region34: #{tpu_custom_call.1} parent=1 // pred_check
      _
    $region35: #{tpu_custom_call.1} parent=1 // pred_check_branch
      %74 = sbr.rel (0) target = $region37
    $region36: #{tpu_custom_call.1} parent=1 // pred_region
      %75 = dma.done [#allocation6], 2048
    $region37: #{tpu_custom_call.1} parent=1 // pred_fallthru
      _
    // Predicated region
    $region38: #{tpu_custom_call.1} parent=1 // pred_check
      _
    $region39: #{tpu_custom_call.1} parent=1 // pred_check_branch
      %77 = sbr.rel (0) target = $region41
    $region40: #{tpu_custom_call.1} parent=1 // pred_region
      %78 = dma.done [#allocation9], 4096
    $region41: #{tpu_custom_call.1} parent=1 // pred_fallthru
      _
    %v80 = vld [vmem:[#allocation2] sm:$0xf]
    %v81 = vld [vmem:[#allocation2 + $0x4] sm:$0xf]
    %v82 = vld [vmem:[#allocation5] sm:$0xf]
    %v83 = vld [vmem:[#allocation5 + $0x4] sm:$0xf]
    %v84 = vld [vmem:[#allocation7] sm:$0xff]
    %v85 = vld [vmem:[#allocation7 + $0x8] sm:$0xff]
    %v86 = vld [vmem:[#allocation7 + $0x10] sm:$0xff]
    %v87 = vld [vmem:[#allocation7 + $0x18] sm:$0xff]
    %v88 = vld [vmem:[#allocation7 + $0x20] sm:$0xff]
    %v89 = vld [vmem:[#allocation7 + $0x28] sm:$0xff]
    %v90 = vld [vmem:[#allocation7 + $0x30] sm:$0xff]
    %v91 = vld [vmem:[#allocation7 + $0x38] sm:$0xff]
    %v92 = vld [vmem:[#allocation7 + $0x40] sm:$0xff]
    %v93 = vld [vmem:[#allocation7 + $0x48] sm:$0xff]
    %v94 = vld [vmem:[#allocation7 + $0x50] sm:$0xff]
    %v95 = vld [vmem:[#allocation7 + $0x58] sm:$0xff]
    %v96 = vld [vmem:[#allocation7 + $0x60] sm:$0xff]
    %v97 = vld [vmem:[#allocation7 + $0x68] sm:$0xff]
    %v98 = vld [vmem:[#allocation7 + $0x70] sm:$0xff]
    %v99 = vld [vmem:[#allocation7 + $0x78] sm:$0xff]
    %v100 = vld [vmem:[%s3] sm:$0x3]
    %v101 = vld [vmem:[%s4] sm:$0x3]
    %v102 = vld [vmem:[#allocation8] sm:$0xff]
    %v103 = vld [vmem:[#allocation8 + $0x8] sm:$0xff]
    %v104 = vld [vmem:[#allocation8 + $0x10] sm:$0xff]
    %v105 = vld [vmem:[#allocation8 + $0x18] sm:$0xff]
    %v106 = vld [vmem:[#allocation8 + $0x20] sm:$0xff]
    %v107 = vld [vmem:[#allocation8 + $0x28] sm:$0xff]
    %v108 = vld [vmem:[#allocation8 + $0x30] sm:$0xff]
    %v109 = vld [vmem:[#allocation8 + $0x38] sm:$0xff]
    %v110 = vld [vmem:[#allocation8 + $0x40] sm:$0xff]
    %v111 = vld [vmem:[#allocation8 + $0x48] sm:$0xff]
    %v112 = vld [vmem:[#allocation8 + $0x50] sm:$0xff]
    %v113 = vld [vmem:[#allocation8 + $0x58] sm:$0xff]
    %v114 = vld [vmem:[#allocation8 + $0x60] sm:$0xff]
    %v115 = vld [vmem:[#allocation8 + $0x68] sm:$0xff]
    %v116 = vld [vmem:[#allocation8 + $0x70] sm:$0xff]
    %v117 = vld [vmem:[#allocation8 + $0x78] sm:$0xff]
    %v118 = vld [vmem:[#allocation8 + $0x80] sm:$0xff]
    %v119 = vld [vmem:[#allocation8 + $0x88] sm:$0xff]
    %v120 = vld [vmem:[#allocation8 + $0x90] sm:$0xff]
    %v121 = vld [vmem:[#allocation8 + $0x98] sm:$0xff]
    %v122 = vld [vmem:[#allocation8 + $0xa0] sm:$0xff]
    %v123 = vld [vmem:[#allocation8 + $0xa8] sm:$0xff]
    %v124 = vld [vmem:[#allocation8 + $0xb0] sm:$0xff]
    %v125 = vld [vmem:[#allocation8 + $0xb8] sm:$0xff]
    %v126 = vld [vmem:[#allocation8 + $0xc0] sm:$0xff]
    %v127 = vld [vmem:[#allocation8 + $0xc8] sm:$0xff]
    %v128 = vld [vmem:[#allocation8 + $0xd0] sm:$0xff]
    %v129 = vld [vmem:[#allocation8 + $0xd8] sm:$0xff]
    %v130 = vld [vmem:[#allocation8 + $0xe0] sm:$0xff]
    %v131 = vld [vmem:[#allocation8 + $0xe8] sm:$0xff]
    %v132 = vld [vmem:[#allocation8 + $0xf0] sm:$0xff]
    %v133 = vld [vmem:[#allocation8 + $0xf8] sm:$0xff]
    %v135 = vlaneseq
    %v136 = vshrl.u32 %v135, 7
    %v137 = vsub.s32 0, %v136
    %v138 = vrot.slane %v100, %v137
    %v139 = vlaneseq
    %v140 = vshrl.u32 %v139, 7
    %v141 = vsub.s32 1, %v140
    %v142 = vrot.slane %v100, %v141
    %v147 = vunpack.c.l.b16 %v80
    %v148 = vunpack.c.l.b16 %v81
    %v149 = vpack.c.b16 %v148, %v147
    %v167 = vunpack.c.l.b16 %v84
    %v168 = vunpack.c.h.b16 %v84
    %v169 = vunpack.c.l.b16 %v85
    %v170 = vunpack.c.h.b16 %v85
    %v171 = vunpack.c.l.b16 %v86
    %v172 = vunpack.c.h.b16 %v86
    %v173 = vunpack.c.l.b16 %v87
    %v174 = vunpack.c.h.b16 %v87
    %v175 = vunpack.c.l.b16 %v88
    %v176 = vunpack.c.h.b16 %v88
    %v177 = vunpack.c.l.b16 %v89
    %v178 = vunpack.c.h.b16 %v89
    %v179 = vunpack.c.l.b16 %v90
    %v180 = vunpack.c.h.b16 %v90
    %v181 = vunpack.c.l.b16 %v91
    %v182 = vunpack.c.h.b16 %v91
    %v183 = vunpack.c.l.b16 %v92
    %v184 = vunpack.c.h.b16 %v92
    %v185 = vunpack.c.l.b16 %v93
    %v186 = vunpack.c.h.b16 %v93
    %v187 = vunpack.c.l.b16 %v94
    %v188 = vunpack.c.h.b16 %v94
    %v189 = vunpack.c.l.b16 %v95
    %v190 = vunpack.c.h.b16 %v95
    %v191 = vunpack.c.l.b16 %v96
    %v192 = vunpack.c.h.b16 %v96
    %v193 = vunpack.c.l.b16 %v97
    %v194 = vunpack.c.h.b16 %v97
    %v195 = vunpack.c.l.b16 %v98
    %v196 = vunpack.c.h.b16 %v98
    %v197 = vunpack.c.l.b16 %v99
    %v198 = vunpack.c.h.b16 %v99
    %v199 = vpack.c.b16 %v169, %v167
    %v200 = vpack.c.b16 %v170, %v168
    %v201 = vpack.c.b16 %v173, %v171
    %v202 = vpack.c.b16 %v174, %v172
    %v203 = vpack.c.b16 %v177, %v175
    %v204 = vpack.c.b16 %v178, %v176
    %v205 = vpack.c.b16 %v181, %v179
    %v206 = vpack.c.b16 %v182, %v180
    %v207 = vpack.c.b16 %v185, %v183
    %v208 = vpack.c.b16 %v186, %v184
    %v209 = vpack.c.b16 %v189, %v187
    %v210 = vpack.c.b16 %v190, %v188
    %v211 = vpack.c.b16 %v193, %v191
    %v212 = vpack.c.b16 %v194, %v192
    %v213 = vpack.c.b16 %v197, %v195
    %v214 = vpack.c.b16 %v198, %v196
    %231 = vmatprep.subr.bf16.mxu0 %v214
    %232 = vmatpush1.bf16.msra.mxu0 %v213
    %233 = vmatprep.subr.bf16.mxu0 %v212
    %234 = vmatpush1.bf16.msra.mxu0 %v211
    %235 = vmatprep.subr.bf16.mxu0 %v210
    %236 = vmatpush1.bf16.msra.mxu0 %v209
    %237 = vmatprep.subr.bf16.mxu0 %v208
    %238 = vmatpush1.bf16.msra.mxu0 %v207
    %239 = vmatprep.subr.bf16.mxu0 %v206
    %240 = vmatpush1.bf16.msra.mxu0 %v205
    %241 = vmatprep.subr.bf16.mxu0 %v204
    %242 = vmatpush1.bf16.msra.mxu0 %v203
    %243 = vmatprep.subr.bf16.mxu0 %v202
    %244 = vmatpush1.bf16.msra.mxu0 %v201
    %245 = vmatprep.subr.bf16.mxu0 %v200
    %246 = vmatpush1.bf16.msra.mxu0 %v199
    %247 = vmatprep.subr.bf16.mxu0 0
    %248 = vmatpush2.bf16.msra.mxu0 0
    %249 = vmatprep.subr.bf16.mxu0 0
    %250 = vmatpush2.bf16.msra.mxu0 0
    %251 = vmatprep.subr.bf16.mxu0 0
    %252 = vmatpush2.bf16.msra.mxu0 0
    %253 = vmatprep.subr.bf16.mxu0 0
    %254 = vmatpush2.bf16.msra.mxu0 0
    %255 = vmatprep.subr.bf16.mxu0 0
    %256 = vmatpush2.bf16.msra.mxu0 0
    %257 = vmatprep.subr.bf16.mxu0 0
    %258 = vmatpush2.bf16.msra.mxu0 0
    %259 = vmatprep.subr.bf16.mxu0 0
    %260 = vmatpush2.bf16.msra.mxu0 0
    %261 = vmatprep.subr.bf16.mxu0 0
    %262 = vmatpush2.bf16.msra.mxu0 0
    %263 = vmatprep.mubr.bf16.mxu0 0
    %264 = vmatmul.mubr.bf16.gmra.mxu0 %v149
    %v265 = vpop.f32.mrf.mxu0
    %v266 = vadd.f32 %v138, %v265
    %v267 = vpop.f32.mrf.mxu0
    %v268 = vadd.f32 %v142, %v267
    %v269 = vpop.f32.mrf.mxu0
    %v270 = vadd.f32 %v138, %v269
    %v271 = vpop.f32.mrf.mxu0
    %v272 = vadd.f32 %v142, %v271
    %273 = vdwg.mxu0
    %v274 = vmax.f32 %v266, 0.0
    %v275 = vmax.f32 %v268, 0.0
    %v276 = vmax.f32 %v270, 0.0
    %v277 = vmax.f32 %v272, 0.0
    %v280 = vunpack.c.l.b16 %v82
    %v281 = vunpack.c.l.b16 %v83
    %v282 = vpack.c.b16 %v281, %v280
    %284 = vmatprep.subr.bf16.mxu0 %v214
    %285 = vmatpush1.bf16.msra.mxu0 %v213
    %286 = vmatprep.subr.bf16.mxu0 %v212
    %287 = vmatpush1.bf16.msra.mxu0 %v211
    %288 = vmatprep.subr.bf16.mxu0 %v210
    %289 = vmatpush1.bf16.msra.mxu0 %v209
    %290 = vmatprep.subr.bf16.mxu0 %v208
    %291 = vmatpush1.bf16.msra.mxu0 %v207
    %292 = vmatprep.subr.bf16.mxu0 %v206
    %293 = vmatpush1.bf16.msra.mxu0 %v205
    %294 = vmatprep.subr.bf16.mxu0 %v204
    %295 = vmatpush1.bf16.msra.mxu0 %v203
    %296 = vmatprep.subr.bf16.mxu0 %v202
    %297 = vmatpush1.bf16.msra.mxu0 %v201
    %298 = vmatprep.subr.bf16.mxu0 %v200
    %299 = vmatpush1.bf16.msra.mxu0 %v199
    %300 = vmatprep.subr.bf16.mxu0 0
    %301 = vmatpush2.bf16.msra.mxu0 0
    %302 = vmatprep.subr.bf16.mxu0 0
    %303 = vmatpush2.bf16.msra.mxu0 0
    %304 = vmatprep.subr.bf16.mxu0 0
    %305 = vmatpush2.bf16.msra.mxu0 0
    %306 = vmatprep.subr.bf16.mxu0 0
    %307 = vmatpush2.bf16.msra.mxu0 0
    %308 = vmatprep.subr.bf16.mxu0 0
    %309 = vmatpush2.bf16.msra.mxu0 0
    %310 = vmatprep.subr.bf16.mxu0 0
    %311 = vmatpush2.bf16.msra.mxu0 0
    %312 = vmatprep.subr.bf16.mxu0 0
    %313 = vmatpush2.bf16.msra.mxu0 0
    %314 = vmatprep.subr.bf16.mxu0 0
    %315 = vmatpush2.bf16.msra.mxu0 0
    %316 = vmatprep.mubr.bf16.mxu0 0
    %317 = vmatmul.mubr.bf16.gmra.mxu0 %v282
    %v318 = vpop.f32.mrf.mxu0
    %v319 = vadd.f32 %v138, %v318
    %v320 = vpop.f32.mrf.mxu0
    %v321 = vadd.f32 %v142, %v320
    %v322 = vpop.f32.mrf.mxu0
    %v323 = vadd.f32 %v138, %v322
    %v324 = vpop.f32.mrf.mxu0
    %v325 = vadd.f32 %v142, %v324
    %326 = vdwg.mxu0
    %v327 = vmax.f32 %v319, 0.0
    %v328 = vmax.f32 %v321, 0.0
    %v329 = vmax.f32 %v323, 0.0
    %v330 = vmax.f32 %v325, 0.0
    %v331 = vsub.f32 %v327, %v274
    %v332 = vsub.f32 %v328, %v275
    %v333 = vsub.f32 %v329, %v276
    %v334 = vsub.f32 %v330, %v277
    %v336 = vlaneseq
    %v337 = vshrl.u32 %v336, 7
    %v338 = vsub.s32 0, %v337
    %v339 = vrot.slane %v101, %v338
    %v340 = vlaneseq
    %v341 = vshrl.u32 %v340, 7
    %v342 = vsub.s32 1, %v341
    %v343 = vrot.slane %v101, %v342
    %v346 = vmul.f32 %v331, %v339
    %v347 = vmul.f32 %v332, %v343
    %v348 = vmul.f32 %v333, %v339
    %v349 = vmul.f32 %v334, %v343
    %350 = vmatprep.subr.mxu0 0.0
    %351 = vmatpush1.msra.mxu0 %v117
    %352 = vmatprep.subr.mxu0 0.0
    %353 = vmatpush1.msra.mxu0 %v116
    %354 = vmatprep.subr.mxu0 0.0
    %355 = vmatpush1.msra.mxu0 %v115
    %356 = vmatprep.subr.mxu0 0.0
    %357 = vmatpush1.msra.mxu0 %v114
    %358 = vmatprep.subr.mxu0 0.0
    %359 = vmatpush1.msra.mxu0 %v113
    %360 = vmatprep.subr.mxu0 0.0
    %361 = vmatpush1.msra.mxu0 %v112
    %362 = vmatprep.subr.mxu0 0.0
    %363 = vmatpush1.msra.mxu0 %v111
    %364 = vmatprep.subr.mxu0 0.0
    %365 = vmatpush1.msra.mxu0 %v110
    %366 = vmatprep.subr.mxu0 0.0
    %367 = vmatpush1.msra.mxu0 %v109
    %368 = vmatprep.subr.mxu0 0.0
    %369 = vmatpush1.msra.mxu0 %v108
    %370 = vmatprep.subr.mxu0 0.0
    %371 = vmatpush1.msra.mxu0 %v107
    %372 = vmatprep.subr.mxu0 0.0
    %373 = vmatpush1.msra.mxu0 %v106
    %374 = vmatprep.subr.mxu0 0.0
    %375 = vmatpush1.msra.mxu0 %v105
    %376 = vmatprep.subr.mxu0 0.0
    %377 = vmatpush1.msra.mxu0 %v104
    %378 = vmatprep.subr.mxu0 0.0
    %379 = vmatpush1.msra.mxu0 %v103
    %380 = vmatprep.subr.mxu0 0.0
    %381 = vmatpush1.msra.mxu0 %v102
    %382 = vmatprep.subr.mxu0 0.0
    %383 = vmatpush2.msra.mxu0 %v133
    %384 = vmatprep.subr.mxu0 0.0
    %385 = vmatpush2.msra.mxu0 %v132
    %386 = vmatprep.subr.mxu0 0.0
    %387 = vmatpush2.msra.mxu0 %v131
    %388 = vmatprep.subr.mxu0 0.0
    %389 = vmatpush2.msra.mxu0 %v130
    %390 = vmatprep.subr.mxu0 0.0
    %391 = vmatpush2.msra.mxu0 %v129
    %392 = vmatprep.subr.mxu0 0.0
    %393 = vmatpush2.msra.mxu0 %v128
    %394 = vmatprep.subr.mxu0 0.0
    %395 = vmatpush2.msra.mxu0 %v127
    %396 = vmatprep.subr.mxu0 0.0
    %397 = vmatpush2.msra.mxu0 %v126
    %398 = vmatprep.subr.mxu0 0.0
    %399 = vmatpush2.msra.mxu0 %v125
    %400 = vmatprep.subr.mxu0 0.0
    %401 = vmatpush2.msra.mxu0 %v124
    %402 = vmatprep.subr.mxu0 0.0
    %403 = vmatpush2.msra.mxu0 %v123
    %404 = vmatprep.subr.mxu0 0.0
    %405 = vmatpush2.msra.mxu0 %v122
    %406 = vmatprep.subr.mxu0 0.0
    %407 = vmatpush2.msra.mxu0 %v121
    %408 = vmatprep.subr.mxu0 0.0
    %409 = vmatpush2.msra.mxu0 %v120
    %410 = vmatprep.subr.mxu0 0.0
    %411 = vmatpush2.msra.mxu0 %v119
    %412 = vmatprep.subr.mxu0 0.0
    %413 = vmatpush2.msra.mxu0 %v118
    %414 = vmatprep.mubr.f32.mxu0 %v347
    %415 = vmatmul.mubr.f32.gmra.mxu0 %v346
    %v416 = vpop.f32.mrf.mxu0
    %v417 = vadd.f32 0.0, %v416
    %v418 = vpop.f32.mrf.mxu0
    %419 = vmatprep.mubr.f32.mxu0 %v349
    %420 = vmatmul.mubr.f32.gmra.mxu0 %v348
    %v421 = vpop.f32.mrf.mxu0
    %v422 = vadd.f32 0.0, %v421
    %v423 = vpop.f32.mrf.mxu0
    %424 = vdwg.mxu0
    %v425 = vmax.f32 %v417, -30.0
    %v426 = vmax.f32 %v422, -30.0
    %v427 = vmin.f32 %v425, 30.0
    %v428 = vmin.f32 %v426, 30.0
    %v429 = vmul.f32 %v427, 1.442695
    %v430 = vpow.pop %v429
    %v431 = vmul.f32 %v428, 1.442695
    %v432 = vpow.pop %v431
    %v433 = vadd.f32 %v430, 1.0
    %v434 = vadd.f32 %v432, 1.0
    %v435 = vrcp.pop %v433
    %v436 = vrcp.pop %v434
    %v437 = vunpack.c.l.bf16 %v80
    %v438 = vunpack.c.l.bf16 %v81
    %v439 = vunpack.c.l.bf16 %v82
    %v440 = vunpack.c.l.bf16 %v83
    %v441 = vsub.f32 %v437, %v439
    %v442 = vsub.f32 %v438, %v440
    %v443 = vmul.f32 %v435, %v441
    %v444 = vmul.f32 %v436, %v442
    %v445 = vadd.f32 %v439, %v443
    %v446 = vadd.f32 %v440, %v444
    %v447 = vpack.c.bf16 %v446, %v445
    %v449 = vunpack.c.l.b16 %v447
    %v450 = vunpack.c.h.b16 %v447
    %v451 = vpack.c.b16 %v449, %v449
    %v452 = vpack.c.b16 %v450, %v450
    %455 = vst [vmem:[#allocation10] sm:$0xf] %v451
    %456 = vst [vmem:[#allocation10 + $0x4] sm:$0xf] %v452
    // Predicated region
    $region42: #{tpu_custom_call.1} parent=1 // pred_check
      _
    $region43: #{tpu_custom_call.1} parent=1 // pred_check_branch
      %458 = sbr.rel (0) target = $region45
    $region44: #{tpu_custom_call.1} parent=1 // pred_region
      %s460 = ssub.s32 128, 128
      %461 = vsyncadd [#allocation4], %s460
      %s462 = sshll.u32 [#allocation10], 4
      %s463 = int_to_ptr.vmem [resolvable:$true] %s462
      %468 = dma.vmem_to_hbm [thread:$0]  %s463, 128, %s6, [#allocation4], 64, 64, 4
    $region45: #{tpu_custom_call.1} parent=1 // pred_fallthru
      _
    // Predicated region
    $region46: #{tpu_custom_call.1} parent=1 // pred_check
      _
    $region47: #{tpu_custom_call.1} parent=1 // pred_check_branch
      %470 = sbr.rel (0) target = $region49
    $region48: #{tpu_custom_call.1} parent=1 // pred_region
      %471 = dma.done [#allocation4], 128
    $region49: #{tpu_custom_call.1} parent=1 // pred_fallthru
      _
    %472 = vsyncpa [#allocation3], 1
    %473 = vsyncpa [#allocation6], 1
    %474 = vsyncpa [#allocation9], 1
    %475 = vsyncpa [#allocation4], 1

</llo_original>
